<compile_context>
chip_gen: v6e
topology: v6e:2x2x1
jax: 0.10.0
libtpu: 0.0.40
codegen_flags: <defaults>
</compile_context>

<pallas_src>
import functools

import jax
import jax.numpy as jnp
from jax.experimental import pallas as pl
from jax.experimental.pallas import tpu as pltpu


def _round_up(x, m):
    return ((x + m - 1) // m) * m


def _router_kernel(x_ref, w_ref, b_ref, scores_ref, idx_ref, *, num_topk):
    # x_ref:      (TILE_T, D)   VMEM
    # w_ref:      (D, E)        VMEM (resident; constant index_map)
    # b_ref:      (1, E)        VMEM
    # scores_ref: (TILE_T, E)   VMEM  f32
    # idx_ref:    (TILE_T, K)   VMEM  int32
    logits = jnp.dot(x_ref[...], w_ref[...],
                     preferred_element_type=jnp.float32,
                     precision=jax.lax.Precision.HIGHEST)
    logits = logits + b_ref[...]

    tile_t, num_e = logits.shape
    lane = jax.lax.broadcasted_iota(jnp.int32, (tile_t, num_e), 1)
    out_col = jax.lax.broadcasted_iota(jnp.int32, (tile_t, num_topk), 1)

    neg_inf = jnp.float32(-jnp.inf)
    selected = jnp.zeros((tile_t, num_e), dtype=jnp.bool_)
    remaining = logits
    idx_out = jnp.zeros((tile_t, num_topk), dtype=jnp.int32)

    # Iterative arg-max top-k. K is small & static (unrolled at trace time);
    # ties break toward the lowest expert index, matching torch.topk/lax.top_k.
    for j in range(num_topk):
        row_max = jnp.max(remaining, axis=-1, keepdims=True)
        is_max = remaining == row_max
        idx_j = jnp.min(jnp.where(is_max, lane, num_e), axis=-1, keepdims=True)
        hit = lane == idx_j
        selected = selected | hit
        remaining = jnp.where(hit, neg_inf, remaining)
        idx_out = jnp.where(out_col == j, idx_j, idx_out)

    # Sparse softmax: scatter(-inf everywhere, top-k logits) + softmax is
    # equivalent to a masked softmax where non-selected experts get exactly 0.
    kept_max = jnp.max(jnp.where(selected, logits, neg_inf), axis=-1,
                       keepdims=True)
    exps = jnp.where(selected, jnp.exp(logits - kept_max), 0.0)
    denom = jnp.sum(exps, axis=-1, keepdims=True)

    scores_ref[...] = (exps / denom).astype(scores_ref.dtype)
    idx_ref[...] = idx_out


def router_forward(x, w, b, *, num_topk, tile_t=256):
    """x: (T, D) f32. w stored (in=D, out=E), b: (E,).

    Returns (router_scores (T, E) f32, topk_indices (T, K) int32)."""
    T, D = x.shape
    E = w.shape[1]
    assert w.shape == (D, E) and b.shape == (E,)
    assert 1 <= num_topk <= E

    # Large token tiles fill the MXU and amortize per-grid-step overhead;
    # clamp for small T, keep a multiple of 8 (f32 sublane), pad + slice.
    tile_t = max(8, min(tile_t, _round_up(T, 8)))
    t_pad = _round_up(T, tile_t)
    if t_pad != T:
        x = jnp.pad(x, ((0, t_pad - T), (0, 0)))

    b_2d = b.reshape(1, E)
    grid = (t_pad // tile_t,)

    kernel = functools.partial(_router_kernel, num_topk=num_topk)

    cost = pl.CostEstimate(
        flops=2 * t_pad * D * E,
        transcendentals=t_pad * E,
        bytes_accessed=(t_pad * D + D * E + E) * 4
        + t_pad * E * 4 + t_pad * num_topk * 4,
    )

    scores, idx = pl.pallas_call(
        kernel,
        out_shape=(
            jax.ShapeDtypeStruct((t_pad, E), jnp.float32),
            jax.ShapeDtypeStruct((t_pad, num_topk), jnp.int32),
        ),
        grid_spec=pltpu.PrefetchScalarGridSpec(
            num_scalar_prefetch=0,
            grid=grid,
            in_specs=[
                pl.BlockSpec((tile_t, D), lambda i: (i, 0)),  # x tile
                pl.BlockSpec((D, E),      lambda i: (0, 0)),  # W  (resident)
                pl.BlockSpec((1, E),      lambda i: (0, 0)),  # b  (resident)
            ],
            out_specs=(
                pl.BlockSpec((tile_t, E),        lambda i: (i, 0)),
                pl.BlockSpec((tile_t, num_topk), lambda i: (i, 0)),
            ),
        ),
        compiler_params=pltpu.CompilerParams(
            dimension_semantics=("parallel",)),  # independent token blocks
        cost_estimate=cost,
    )(x, w, b_2d)

    return scores[:T], idx[:T]


if __name__ == "__main__":
    batch, seq, emb_dim = 2, 8, 32
    num_experts, num_topk = 8, 2

    key = jax.random.PRNGKey(0)
    kx, kw, kb = jax.random.split(key, 3)

    x = jax.random.normal(kx, (batch, seq, emb_dim), jnp.float32)
    lim = 1.0 / (emb_dim ** 0.5)
    # Stored as (in, out) so the kernel computes x @ W (nn.Linear is (out, in)).
    w = jax.random.uniform(kw, (emb_dim, num_experts), jnp.float32, -lim, lim)
    b = jax.random.uniform(kb, (num_experts,), jnp.float32, -lim, lim)

    x2d = x.reshape(batch * seq, emb_dim)   # (T, D) token rows

    scores, topk_idx = router_forward(x2d, w, b, num_topk=num_topk)
    scores, topk_idx = jax.block_until_ready((scores, topk_idx))

    # Pure-JAX reference of the Router forward pass.
    logits = jnp.dot(x2d, w, precision=jax.lax.Precision.HIGHEST) + b
    ref_vals, ref_idx = jax.lax.top_k(logits, num_topk)
    sparse = jnp.full_like(logits, -jnp.inf)
    rows = jnp.arange(x2d.shape[0])[:, None]
    sparse = sparse.at[rows, ref_idx].set(ref_vals)
    ref_scores = jax.nn.softmax(sparse, axis=-1)

    assert scores.shape == (batch * seq, num_experts)
    assert topk_idx.shape == (batch * seq, num_topk)
    assert jnp.allclose(scores, ref_scores, atol=1e-4, rtol=1e-4), "scores mismatch"
    assert jnp.array_equal(topk_idx, ref_idx), "indices mismatch"

    # Back to the module's (B, S, ...) output shapes.
    _ = scores.reshape(batch, seq, num_experts)
    _ = topk_idx.reshape(batch, seq, num_topk)
    print("KERNEL_OK")
</pallas_src>

<mosaic_0001>
module attributes {stable_mosaic.version = 11 : i64} {
  func.func @_router_kernel(%arg0: i32, %arg1: memref<16x32xf32, #tpu.memory_space<vmem>>, %arg2: memref<32x8xf32, #tpu.memory_space<vmem>>, %arg3: memref<1x8xf32, #tpu.memory_space<vmem>>, %arg4: memref<16x8xf32, #tpu.memory_space<vmem>>, %arg5: memref<16x2xi32, #tpu.memory_space<vmem>>) attributes {dimension_semantics = [#tpu.dimension_semantics<parallel>], iteration_bounds = array<i64: 1>, scalar_prefetch = 0 : i64, scratch_operands = 0 : i64, tpu.core_type = #tpu.core_type<tc>, window_params = [{transform_indices = @transform_0, window_bounds = array<i64: 16, 32>}, {pipeline_mode = #tpu.pipeline_mode<synchronous>, transform_indices = @transform_1, window_bounds = array<i64: 32, 8>}, {pipeline_mode = #tpu.pipeline_mode<synchronous>, transform_indices = @transform_2, window_bounds = array<i64: 1, 8>}, {transform_indices = @transform_3, window_bounds = array<i64: 16, 8>}, {transform_indices = @transform_4, window_bounds = array<i64: 16, 2>}]} {
    %c0 = arith.constant 0 : index
    %c0_0 = arith.constant 0 : index
    %0 = vector.load %arg1[%c0, %c0_0] : memref<16x32xf32, #tpu.memory_space<vmem>>, vector<16x32xf32>
    %c0_1 = arith.constant 0 : index
    %c0_2 = arith.constant 0 : index
    %1 = vector.load %arg2[%c0_1, %c0_2] : memref<32x8xf32, #tpu.memory_space<vmem>>, vector<32x8xf32>
    %cst = arith.constant dense<0.000000e+00> : vector<16x8xf32>
    %2 = tpu.matmul %0, %1, %cst {dimension_numbers = #tpu.dot_dimension_numbers<[1], [0], [0], [1], [0, 0, 1, 1], [], []>, precision = #tpu.contract_precision<fp32>} : vector<16x32xf32>, vector<32x8xf32>, vector<16x8xf32> -> vector<16x8xf32>
    %c0_3 = arith.constant 0 : index
    %c0_4 = arith.constant 0 : index
    %3 = vector.load %arg3[%c0_3, %c0_4] : memref<1x8xf32, #tpu.memory_space<vmem>>, vector<1x8xf32>
    %4 = vector.broadcast %3 : vector<1x8xf32> to vector<16x8xf32>
    %5 = arith.addf %2, %4 : vector<16x8xf32>
    %6 = tpu.iota {dimensions = array<i32: 1>} : vector<16x8xi32>
    %7 = tpu.iota {dimensions = array<i32: 1>} : vector<16x2xi32>
    %false = arith.constant false
    %8 = vector.broadcast %false : i1 to vector<16x8xi1>
    %c0_i32 = arith.constant 0 : i32
    %9 = vector.broadcast %c0_i32 : i32 to vector<16x2xi32>
    %cst_5 = arith.constant dense<0xFF800000> : vector<16xf32>
    %10 = vector.multi_reduction <maximumf>, %5, %cst_5 [1] : vector<16x8xf32> to vector<16xf32>
    %11 = vector.shape_cast %10 : vector<16xf32> to vector<16x1xf32>
    %12 = vector.broadcast %11 : vector<16x1xf32> to vector<16x8xf32>
    %13 = arith.cmpf oeq, %5, %12 : vector<16x8xf32>
    %c8_i32 = arith.constant 8 : i32
    %14 = vector.broadcast %c8_i32 : i32 to vector<16x8xi32>
    %15 = arith.select %13, %6, %14 : vector<16x8xi1>, vector<16x8xi32>
    %cst_6 = arith.constant dense<2147483647> : vector<16xi32>
    %16 = vector.multi_reduction <minsi>, %15, %cst_6 [1] : vector<16x8xi32> to vector<16xi32>
    %17 = vector.shape_cast %16 : vector<16xi32> to vector<16x1xi32>
    %18 = vector.broadcast %17 : vector<16x1xi32> to vector<16x8xi32>
    %19 = arith.cmpi eq, %6, %18 : vector<16x8xi32>
    %20 = arith.ori %8, %19 : vector<16x8xi1>
    %cst_7 = arith.constant 0xFF800000 : f32
    %21 = vector.broadcast %cst_7 : f32 to vector<16x8xf32>
    %22 = arith.select %19, %21, %5 : vector<16x8xi1>, vector<16x8xf32>
    %c0_i32_8 = arith.constant 0 : i32
    %23 = vector.broadcast %c0_i32_8 : i32 to vector<16x2xi32>
    %24 = arith.cmpi eq, %7, %23 : vector<16x2xi32>
    %25 = vector.shape_cast %17 : vector<16x1xi32> to vector<16x1xi32>
    %26 = vector.broadcast %25 : vector<16x1xi32> to vector<16x2xi32>
    %27 = arith.select %24, %26, %9 : vector<16x2xi1>, vector<16x2xi32>
    %cst_9 = arith.constant dense<0xFF800000> : vector<16xf32>
    %28 = vector.multi_reduction <maximumf>, %22, %cst_9 [1] : vector<16x8xf32> to vector<16xf32>
    %29 = vector.shape_cast %28 : vector<16xf32> to vector<16x1xf32>
    %30 = vector.broadcast %29 : vector<16x1xf32> to vector<16x8xf32>
    %31 = arith.cmpf oeq, %22, %30 : vector<16x8xf32>
    %c8_i32_10 = arith.constant 8 : i32
    %32 = vector.broadcast %c8_i32_10 : i32 to vector<16x8xi32>
    %33 = arith.select %31, %6, %32 : vector<16x8xi1>, vector<16x8xi32>
    %cst_11 = arith.constant dense<2147483647> : vector<16xi32>
    %34 = vector.multi_reduction <minsi>, %33, %cst_11 [1] : vector<16x8xi32> to vector<16xi32>
    %35 = vector.shape_cast %34 : vector<16xi32> to vector<16x1xi32>
    %36 = vector.broadcast %35 : vector<16x1xi32> to vector<16x8xi32>
    %37 = arith.cmpi eq, %6, %36 : vector<16x8xi32>
    %38 = arith.ori %20, %37 : vector<16x8xi1>
    %c1_i32 = arith.constant 1 : i32
    %39 = vector.broadcast %c1_i32 : i32 to vector<16x2xi32>
    %40 = arith.cmpi eq, %7, %39 : vector<16x2xi32>
    %41 = vector.shape_cast %35 : vector<16x1xi32> to vector<16x1xi32>
    %42 = vector.broadcast %41 : vector<16x1xi32> to vector<16x2xi32>
    %43 = arith.select %40, %42, %27 : vector<16x2xi1>, vector<16x2xi32>
    %cst_12 = arith.constant 0xFF800000 : f32
    %44 = vector.broadcast %cst_12 : f32 to vector<16x8xf32>
    %45 = arith.select %38, %5, %44 : vector<16x8xi1>, vector<16x8xf32>
    %cst_13 = arith.constant dense<0xFF800000> : vector<16xf32>
    %46 = vector.multi_reduction <maximumf>, %45, %cst_13 [1] : vector<16x8xf32> to vector<16xf32>
    %47 = vector.shape_cast %46 : vector<16xf32> to vector<16x1xf32>
    %48 = vector.broadcast %47 : vector<16x1xf32> to vector<16x8xf32>
    %49 = arith.subf %5, %48 : vector<16x8xf32>
    %50 = math.exp %49 : vector<16x8xf32>
    %cst_14 = arith.constant 0.000000e+00 : f32
    %51 = vector.broadcast %cst_14 : f32 to vector<16x8xf32>
    %52 = arith.select %38, %50, %51 : vector<16x8xi1>, vector<16x8xf32>
    %cst_15 = arith.constant dense<0.000000e+00> : vector<16xf32>
    %53 = vector.multi_reduction <add>, %52, %cst_15 [1] : vector<16x8xf32> to vector<16xf32>
    %54 = vector.shape_cast %53 : vector<16xf32> to vector<16x1xf32>
    %55 = vector.broadcast %54 : vector<16x1xf32> to vector<16x8xf32>
    %56 = arith.divf %52, %55 : vector<16x8xf32>
    %c0_16 = arith.constant 0 : index
    %c0_17 = arith.constant 0 : index
    %57 = vector.load %arg4[%c0_16, %c0_17] : memref<16x8xf32, #tpu.memory_space<vmem>>, vector<16x8xf32>
    tpu.vector_store %arg4[%c0_16, %c0_17], %56 {strides = array<i32>} : memref<16x8xf32, #tpu.memory_space<vmem>>, vector<16x8xf32>,
    %c0_18 = arith.constant 0 : index
    %c0_19 = arith.constant 0 : index
    %58 = vector.load %arg5[%c0_18, %c0_19] : memref<16x2xi32, #tpu.memory_space<vmem>>, vector<16x2xi32>
    tpu.vector_store %arg5[%c0_18, %c0_19], %43 {strides = array<i32>} : memref<16x2xi32, #tpu.memory_space<vmem>>, vector<16x2xi32>,
    return
  }
  func.func @transform_0(%arg0: i32) -> (i32, i32) {
    %c0_i32 = arith.constant 0 : i32
    %c0_i32_0 = arith.constant 0 : i32
    return %arg0, %c0_i32 : i32, i32
  }
  func.func @transform_1(%arg0: i32) -> (i32, i32) {
    %c0_i32 = arith.constant 0 : i32
    %c0_i32_0 = arith.constant 0 : i32
    %c0_i32_1 = arith.constant 0 : i32
    return %c0_i32, %c0_i32_0 : i32, i32
  }
  func.func @transform_2(%arg0: i32) -> (i32, i32) {
    %c0_i32 = arith.constant 0 : i32
    %c0_i32_0 = arith.constant 0 : i32
    %c0_i32_1 = arith.constant 0 : i32
    return %c0_i32, %c0_i32_0 : i32, i32
  }
  func.func @transform_3(%arg0: i32) -> (i32, i32) {
    %c0_i32 = arith.constant 0 : i32
    %c0_i32_0 = arith.constant 0 : i32
    return %arg0, %c0_i32 : i32, i32
  }
  func.func @transform_4(%arg0: i32) -> (i32, i32) {
    %c0_i32 = arith.constant 0 : i32
    %c0_i32_0 = arith.constant 0 : i32
    return %arg0, %c0_i32 : i32, i32
  }
}

</mosaic_0001>

<llo_original>
// kernel: tpu_custom_call.1
$region0: #{tpu_custom_call.1}
  #allocation0 [shape = 'u32[]', space=smem, size = 0x4, offset = 0x4, fixed_abs, tag = 'smem constant byte address 0x4 - core index']
  #allocation1 [shape = 'u32[144,128]{1,0:T(1,128)}', space=vmem, size = 0x12000, scoped, tag = 'internal scratch']
  %s0 = inlined_call_operand.vmem [shape: f32[16,32], index: 0, kind: input, shape index: {}]
  %s1 = inlined_call_operand.vmem [shape: f32[32,8], index: 1, kind: input, shape index: {}]
  %s2 = inlined_call_operand.vmem [shape: f32[1,8], index: 2, kind: input, shape index: {}]
  %s3 = inlined_call_operand.vmem [shape: f32[16,8], index: 3, kind: output, shape index: {0}]
  %s4 = inlined_call_operand.vmem [shape: s32[16,2], index: 4, kind: output, shape index: {1}]
  %5 = xla_tuple %s3, %s4
  %s6 = sld [smem:[#allocation0]]
  $region30: #{tpu_custom_call.1} parent=0
    _
  %s8 = ssub.s32 1, %s6
  %s9 = scalar_select 0, %s8, %s6
  // Predicated region
  $region2: #{tpu_custom_call.1} parent=0 // pred_check
    _
  $region3: #{tpu_custom_call.1} parent=0 // pred_check_branch
    %11 = sbr.rel (0) target = $region5
  $region4: #{tpu_custom_call.1} parent=0 // pred_region
    _
  $region5: #{tpu_custom_call.1} parent=0 // pred_fallthru
    _
  // Predicated region
  $region6: #{tpu_custom_call.1} parent=0 // pred_check
    _
  $region7: #{tpu_custom_call.1} parent=0 // pred_check_branch
    %13 = sbr.rel (0) target = $region9
  $region8: #{tpu_custom_call.1} parent=0 // pred_region
    _
  $region9: #{tpu_custom_call.1} parent=0 // pred_fallthru
    _
  // Predicated region
  $region10: #{tpu_custom_call.1} parent=0 // pred_check
    _
  $region11: #{tpu_custom_call.1} parent=0 // pred_check_branch
    %15 = sbr.rel (0) target = $region13
  $region12: #{tpu_custom_call.1} parent=0 // pred_region
    _
  $region13: #{tpu_custom_call.1} parent=0 // pred_fallthru
    _
  %v16 = vld [vmem:[%s0] sm:$0xff]
  %v17 = vld [vmem:[%s0 + $0x8] sm:$0xff]
  %v18 = vld [vmem:[%s1] sm:$0xff]
  %v19 = vld [vmem:[%s1 + $0x8] sm:$0xff]
  %v20 = vld [vmem:[%s1 + $0x10] sm:$0xff]
  %v21 = vld [vmem:[%s1 + $0x18] sm:$0xff]
  %v22 = vld [vmem:[%s2] sm:$0x1]
  %v24 = vlaneseq
  %v25 = vshrl.u32 %v24, 7
  %v26 = vsub.s32 0, %v25
  %v27 = vrot.slane %v22, %v26
  %vm29 = vcmask 261120
  %v31 = vsel %vm29, %v16, 0
  %v34 = vsel %vm29, %v17, 0
  %36 = vmatprep.subr.mxu0 0.0
  %37 = vmatpush1.msra.mxu0 0.0
  %38 = vmatprep.subr.mxu0 0.0
  %39 = vmatpush1.msra.mxu0 0.0
  %40 = vmatprep.subr.mxu0 0.0
  %41 = vmatpush1.msra.mxu0 0.0
  %42 = vmatprep.subr.mxu0 0.0
  %43 = vmatpush1.msra.mxu0 0.0
  %44 = vmatprep.subr.mxu0 0.0
  %45 = vmatpush1.msra.mxu0 0.0
  %46 = vmatprep.subr.mxu0 0.0
  %47 = vmatpush1.msra.mxu0 0.0
  %48 = vmatprep.subr.mxu0 0.0
  %49 = vmatpush1.msra.mxu0 0.0
  %50 = vmatprep.subr.mxu0 0.0
  %51 = vmatpush1.msra.mxu0 0.0
  %52 = vmatprep.subr.mxu0 0.0
  %53 = vmatpush1.msra.mxu0 0.0
  %54 = vmatprep.subr.mxu0 0.0
  %55 = vmatpush1.msra.mxu0 0.0
  %56 = vmatprep.subr.mxu0 0.0
  %57 = vmatpush1.msra.mxu0 0.0
  %58 = vmatprep.subr.mxu0 0.0
  %59 = vmatpush1.msra.mxu0 0.0
  %60 = vmatprep.subr.mxu0 0.0
  %v61 = vand.u32 %v21, 4294901760
  %62 = vmatpush1.msra.mxu0 %v61
  %63 = vmatprep.subr.mxu0 0.0
  %v64 = vand.u32 %v20, 4294901760
  %65 = vmatpush1.msra.mxu0 %v64
  %66 = vmatprep.subr.mxu0 0.0
  %v67 = vand.u32 %v19, 4294901760
  %68 = vmatpush1.msra.mxu0 %v67
  %69 = vmatprep.subr.mxu0 0.0
  %v70 = vand.u32 %v18, 4294901760
  %71 = vmatpush1.msra.mxu0 %v70
  %72 = vmatprep.subr.mxu0 0.0
  %73 = vmatpush2.msra.mxu0 0.0
  %74 = vmatprep.subr.mxu0 0.0
  %75 = vmatpush2.msra.mxu0 0.0
  %76 = vmatprep.subr.mxu0 0.0
  %77 = vmatpush2.msra.mxu0 0.0
  %78 = vmatprep.subr.mxu0 0.0
  %79 = vmatpush2.msra.mxu0 0.0
  %80 = vmatprep.subr.mxu0 0.0
  %81 = vmatpush2.msra.mxu0 0.0
  %82 = vmatprep.subr.mxu0 0.0
  %83 = vmatpush2.msra.mxu0 0.0
  %84 = vmatprep.subr.mxu0 0.0
  %85 = vmatpush2.msra.mxu0 0.0
  %86 = vmatprep.subr.mxu0 0.0
  %87 = vmatpush2.msra.mxu0 0.0
  %88 = vmatprep.subr.mxu0 0.0
  %89 = vmatpush2.msra.mxu0 0.0
  %90 = vmatprep.subr.mxu0 0.0
  %91 = vmatpush2.msra.mxu0 0.0
  %92 = vmatprep.subr.mxu0 0.0
  %93 = vmatpush2.msra.mxu0 0.0
  %94 = vmatprep.subr.mxu0 0.0
  %95 = vmatpush2.msra.mxu0 0.0
  %96 = vmatprep.subr.mxu0 0.0
  %97 = vmatpush2.msra.mxu0 0.0
  %98 = vmatprep.subr.mxu0 0.0
  %99 = vmatpush2.msra.mxu0 0.0
  %100 = vmatprep.subr.mxu0 0.0
  %101 = vmatpush2.msra.mxu0 0.0
  %102 = vmatprep.subr.mxu0 0.0
  %103 = vmatpush2.msra.mxu0 0.0
  %104 = vmatprep.mubr.f32.mxu0 0.0
  %v105 = vand.u32 %v31, 4294901760
  %v106 = vsub.f32 %v31, %v105
  %v107 = vand.u32 %v106, 4294901760
  %v108 = vsub.f32 %v106, %v107
  %v109 = vand.u32 %v108, 4294901760
  %110 = vmatmul.mubr.f32.gmra.mxu0 %v109
  %v111 = vpop.f32.mrf.mxu0
  %v112 = vadd.f32 %v27, %v111
  %v113 = vpop.f32.mrf.mxu0
  %114 = vmatprep.mubr.f32.mxu0 0.0
  %v115 = vand.u32 %v34, 4294901760
  %v116 = vsub.f32 %v34, %v115
  %v117 = vand.u32 %v116, 4294901760
  %v118 = vsub.f32 %v116, %v117
  %v119 = vand.u32 %v118, 4294901760
  %120 = vmatmul.mubr.f32.gmra.mxu0 %v119
  %v121 = vpop.f32.mrf.mxu0
  %v122 = vadd.f32 %v27, %v121
  %v123 = vpop.f32.mrf.mxu0
  %124 = vdwg.mxu0
  %125 = vmatprep.subr.mxu0 0.0
  %126 = vmatpush1.msra.mxu0 0.0
  %127 = vmatprep.subr.mxu0 0.0
  %128 = vmatpush1.msra.mxu0 0.0
  %129 = vmatprep.subr.mxu0 0.0
  %130 = vmatpush1.msra.mxu0 0.0
  %131 = vmatprep.subr.mxu0 0.0
  %132 = vmatpush1.msra.mxu0 0.0
  %133 = vmatprep.subr.mxu0 0.0
  %134 = vmatpush1.msra.mxu0 0.0
  %135 = vmatprep.subr.mxu0 0.0
  %136 = vmatpush1.msra.mxu0 0.0
  %137 = vmatprep.subr.mxu0 0.0
  %138 = vmatpush1.msra.mxu0 0.0
  %139 = vmatprep.subr.mxu0 0.0
  %140 = vmatpush1.msra.mxu0 0.0
  %141 = vmatprep.subr.mxu0 0.0
  %142 = vmatpush1.msra.mxu0 0.0
  %143 = vmatprep.subr.mxu0 0.0
  %144 = vmatpush1.msra.mxu0 0.0
  %145 = vmatprep.subr.mxu0 0.0
  %146 = vmatpush1.msra.mxu0 0.0
  %147 = vmatprep.subr.mxu0 0.0
  %148 = vmatpush1.msra.mxu0 0.0
  %149 = vmatprep.subr.mxu0 0.0
  %v150 = vand.u32 %v21, 4294901760
  %v151 = vsub.f32 %v21, %v150
  %v152 = vand.u32 %v151, 4294901760
  %v153 = vsub.f32 %v151, %v152
  %v154 = vand.u32 %v153, 4294901760
  %155 = vmatpush1.msra.mxu0 %v154
  %156 = vmatprep.subr.mxu0 0.0
  %v157 = vand.u32 %v20, 4294901760
  %v158 = vsub.f32 %v20, %v157
  %v159 = vand.u32 %v158, 4294901760
  %v160 = vsub.f32 %v158, %v159
  %v161 = vand.u32 %v160, 4294901760
  %162 = vmatpush1.msra.mxu0 %v161
  %163 = vmatprep.subr.mxu0 0.0
  %v164 = vand.u32 %v19, 4294901760
  %v165 = vsub.f32 %v19, %v164
  %v166 = vand.u32 %v165, 4294901760
  %v167 = vsub.f32 %v165, %v166
  %v168 = vand.u32 %v167, 4294901760
  %169 = vmatpush1.msra.mxu0 %v168
  %170 = vmatprep.subr.mxu0 0.0
  %v171 = vand.u32 %v18, 4294901760
  %v172 = vsub.f32 %v18, %v171
  %v173 = vand.u32 %v172, 4294901760
  %v174 = vsub.f32 %v172, %v173
  %v175 = vand.u32 %v174, 4294901760
  %176 = vmatpush1.msra.mxu0 %v175
  %177 = vmatprep.subr.mxu0 0.0
  %178 = vmatpush2.msra.mxu0 0.0
  %179 = vmatprep.subr.mxu0 0.0
  %180 = vmatpush2.msra.mxu0 0.0
  %181 = vmatprep.subr.mxu0 0.0
  %182 = vmatpush2.msra.mxu0 0.0
  %183 = vmatprep.subr.mxu0 0.0
  %184 = vmatpush2.msra.mxu0 0.0
  %185 = vmatprep.subr.mxu0 0.0
  %186 = vmatpush2.msra.mxu0 0.0
  %187 = vmatprep.subr.mxu0 0.0
  %188 = vmatpush2.msra.mxu0 0.0
  %189 = vmatprep.subr.mxu0 0.0
  %190 = vmatpush2.msra.mxu0 0.0
  %191 = vmatprep.subr.mxu0 0.0
  %192 = vmatpush2.msra.mxu0 0.0
  %193 = vmatprep.subr.mxu0 0.0
  %194 = vmatpush2.msra.mxu0 0.0
  %195 = vmatprep.subr.mxu0 0.0
  %196 = vmatpush2.msra.mxu0 0.0
  %197 = vmatprep.subr.mxu0 0.0
  %198 = vmatpush2.msra.mxu0 0.0
  %199 = vmatprep.subr.mxu0 0.0
  %200 = vmatpush2.msra.mxu0 0.0
  %201 = vmatprep.subr.mxu0 0.0
  %202 = vmatpush2.msra.mxu0 0.0
  %203 = vmatprep.subr.mxu0 0.0
  %204 = vmatpush2.msra.mxu0 0.0
  %205 = vmatprep.subr.mxu0 0.0
  %206 = vmatpush2.msra.mxu0 0.0
  %207 = vmatprep.subr.mxu0 0.0
  %208 = vmatpush2.msra.mxu0 0.0
  %209 = vmatprep.mubr.f32.mxu0 0.0
  %v210 = vand.u32 %v31, 4294901760
  %211 = vmatmul.mubr.f32.gmra.mxu0 %v210
  %v212 = vpop.f32.mrf.mxu0
  %v213 = vadd.f32 %v112, %v212
  %v214 = vpop.f32.mrf.mxu0
  %215 = vmatprep.mubr.f32.mxu0 0.0
  %v216 = vand.u32 %v34, 4294901760
  %217 = vmatmul.mubr.f32.gmra.mxu0 %v216
  %v218 = vpop.f32.mrf.mxu0
  %v219 = vadd.f32 %v122, %v218
  %v220 = vpop.f32.mrf.mxu0
  %221 = vdwg.mxu0
  %222 = vmatprep.subr.mxu0 0.0
  %223 = vmatpush1.msra.mxu0 0.0
  %224 = vmatprep.subr.mxu0 0.0
  %225 = vmatpush1.msra.mxu0 0.0
  %226 = vmatprep.subr.mxu0 0.0
  %227 = vmatpush1.msra.mxu0 0.0
  %228 = vmatprep.subr.mxu0 0.0
  %229 = vmatpush1.msra.mxu0 0.0
  %230 = vmatprep.subr.mxu0 0.0
  %231 = vmatpush1.msra.mxu0 0.0
  %232 = vmatprep.subr.mxu0 0.0
  %233 = vmatpush1.msra.mxu0 0.0
  %234 = vmatprep.subr.mxu0 0.0
  %235 = vmatpush1.msra.mxu0 0.0
  %236 = vmatprep.subr.mxu0 0.0
  %237 = vmatpush1.msra.mxu0 0.0
  %238 = vmatprep.subr.mxu0 0.0
  %239 = vmatpush1.msra.mxu0 0.0
  %240 = vmatprep.subr.mxu0 0.0
  %241 = vmatpush1.msra.mxu0 0.0
  %242 = vmatprep.subr.mxu0 0.0
  %243 = vmatpush1.msra.mxu0 0.0
  %244 = vmatprep.subr.mxu0 0.0
  %245 = vmatpush1.msra.mxu0 0.0
  %246 = vmatprep.subr.mxu0 0.0
  %v247 = vand.u32 %v21, 4294901760
  %v248 = vsub.f32 %v21, %v247
  %249 = vmatpush1.msra.mxu0 %v248
  %250 = vmatprep.subr.mxu0 0.0
  %v251 = vand.u32 %v20, 4294901760
  %v252 = vsub.f32 %v20, %v251
  %253 = vmatpush1.msra.mxu0 %v252
  %254 = vmatprep.subr.mxu0 0.0
  %v255 = vand.u32 %v19, 4294901760
  %v256 = vsub.f32 %v19, %v255
  %257 = vmatpush1.msra.mxu0 %v256
  %258 = vmatprep.subr.mxu0 0.0
  %v259 = vand.u32 %v18, 4294901760
  %v260 = vsub.f32 %v18, %v259
  %261 = vmatpush1.msra.mxu0 %v260
  %262 = vmatprep.subr.mxu0 0.0
  %263 = vmatpush2.msra.mxu0 0.0
  %264 = vmatprep.subr.mxu0 0.0
  %265 = vmatpush2.msra.mxu0 0.0
  %266 = vmatprep.subr.mxu0 0.0
  %267 = vmatpush2.msra.mxu0 0.0
  %268 = vmatprep.subr.mxu0 0.0
  %269 = vmatpush2.msra.mxu0 0.0
  %270 = vmatprep.subr.mxu0 0.0
  %271 = vmatpush2.msra.mxu0 0.0
  %272 = vmatprep.subr.mxu0 0.0
  %273 = vmatpush2.msra.mxu0 0.0
  %274 = vmatprep.subr.mxu0 0.0
  %275 = vmatpush2.msra.mxu0 0.0
  %276 = vmatprep.subr.mxu0 0.0
  %277 = vmatpush2.msra.mxu0 0.0
  %278 = vmatprep.subr.mxu0 0.0
  %279 = vmatpush2.msra.mxu0 0.0
  %280 = vmatprep.subr.mxu0 0.0
  %281 = vmatpush2.msra.mxu0 0.0
  %282 = vmatprep.subr.mxu0 0.0
  %283 = vmatpush2.msra.mxu0 0.0
  %284 = vmatprep.subr.mxu0 0.0
  %285 = vmatpush2.msra.mxu0 0.0
  %286 = vmatprep.subr.mxu0 0.0
  %287 = vmatpush2.msra.mxu0 0.0
  %288 = vmatprep.subr.mxu0 0.0
  %289 = vmatpush2.msra.mxu0 0.0
  %290 = vmatprep.subr.mxu0 0.0
  %291 = vmatpush2.msra.mxu0 0.0
  %292 = vmatprep.subr.mxu0 0.0
  %293 = vmatpush2.msra.mxu0 0.0
  %294 = vmatprep.mubr.f32.mxu0 0.0
  %v295 = vand.u32 %v31, 4294901760
  %v296 = vsub.f32 %v31, %v295
  %297 = vmatmul.mubr.f32.gmra.mxu0 %v296
  %v298 = vpop.f32.mrf.mxu0
  %v299 = vadd.f32 %v213, %v298
  %v300 = vpop.f32.mrf.mxu0
  %301 = vmatprep.mubr.f32.mxu0 0.0
  %v302 = vand.u32 %v34, 4294901760
  %v303 = vsub.f32 %v34, %v302
  %304 = vmatmul.mubr.f32.gmra.mxu0 %v303
  %v305 = vpop.f32.mrf.mxu0
  %v306 = vadd.f32 %v219, %v305
  %v307 = vpop.f32.mrf.mxu0
  %308 = vdwg.mxu0
  %309 = vmatprep.subr.mxu0 0.0
  %310 = vmatpush1.msra.mxu0 0.0
  %311 = vmatprep.subr.mxu0 0.0
  %312 = vmatpush1.msra.mxu0 0.0
  %313 = vmatprep.subr.mxu0 0.0
  %314 = vmatpush1.msra.mxu0 0.0
  %315 = vmatprep.subr.mxu0 0.0
  %316 = vmatpush1.msra.mxu0 0.0
  %317 = vmatprep.subr.mxu0 0.0
  %318 = vmatpush1.msra.mxu0 0.0
  %319 = vmatprep.subr.mxu0 0.0
  %320 = vmatpush1.msra.mxu0 0.0
  %321 = vmatprep.subr.mxu0 0.0
  %322 = vmatpush1.msra.mxu0 0.0
  %323 = vmatprep.subr.mxu0 0.0
  %324 = vmatpush1.msra.mxu0 0.0
  %325 = vmatprep.subr.mxu0 0.0
  %326 = vmatpush1.msra.mxu0 0.0
  %327 = vmatprep.subr.mxu0 0.0
  %328 = vmatpush1.msra.mxu0 0.0
  %329 = vmatprep.subr.mxu0 0.0
  %330 = vmatpush1.msra.mxu0 0.0
  %331 = vmatprep.subr.mxu0 0.0
  %332 = vmatpush1.msra.mxu0 0.0
  %333 = vmatprep.subr.mxu0 0.0
  %v334 = vand.u32 %v21, 4294901760
  %335 = vmatpush1.msra.mxu0 %v334
  %336 = vmatprep.subr.mxu0 0.0
  %v337 = vand.u32 %v20, 4294901760
  %338 = vmatpush1.msra.mxu0 %v337
  %339 = vmatprep.subr.mxu0 0.0
  %v340 = vand.u32 %v19, 4294901760
  %341 = vmatpush1.msra.mxu0 %v340
  %342 = vmatprep.subr.mxu0 0.0
  %v343 = vand.u32 %v18, 4294901760
  %344 = vmatpush1.msra.mxu0 %v343
  %345 = vmatprep.subr.mxu0 0.0
  %346 = vmatpush2.msra.mxu0 0.0
  %347 = vmatprep.subr.mxu0 0.0
  %348 = vmatpush2.msra.mxu0 0.0
  %349 = vmatprep.subr.mxu0 0.0
  %350 = vmatpush2.msra.mxu0 0.0
  %351 = vmatprep.subr.mxu0 0.0
  %352 = vmatpush2.msra.mxu0 0.0
  %353 = vmatprep.subr.mxu0 0.0
  %354 = vmatpush2.msra.mxu0 0.0
  %355 = vmatprep.subr.mxu0 0.0
  %356 = vmatpush2.msra.mxu0 0.0
  %357 = vmatprep.subr.mxu0 0.0
  %358 = vmatpush2.msra.mxu0 0.0
  %359 = vmatprep.subr.mxu0 0.0
  %360 = vmatpush2.msra.mxu0 0.0
  %361 = vmatprep.subr.mxu0 0.0
  %362 = vmatpush2.msra.mxu0 0.0
  %363 = vmatprep.subr.mxu0 0.0
  %364 = vmatpush2.msra.mxu0 0.0
  %365 = vmatprep.subr.mxu0 0.0
  %366 = vmatpush2.msra.mxu0 0.0
  %367 = vmatprep.subr.mxu0 0.0
  %368 = vmatpush2.msra.mxu0 0.0
  %369 = vmatprep.subr.mxu0 0.0
  %370 = vmatpush2.msra.mxu0 0.0
  %371 = vmatprep.subr.mxu0 0.0
  %372 = vmatpush2.msra.mxu0 0.0
  %373 = vmatprep.subr.mxu0 0.0
  %374 = vmatpush2.msra.mxu0 0.0
  %375 = vmatprep.subr.mxu0 0.0
  %376 = vmatpush2.msra.mxu0 0.0
  %377 = vmatprep.mubr.f32.mxu0 0.0
  %v378 = vand.u32 %v31, 4294901760
  %v379 = vsub.f32 %v31, %v378
  %v380 = vand.u32 %v379, 4294901760
  %381 = vmatmul.mubr.f32.gmra.mxu0 %v380
  %v382 = vpop.f32.mrf.mxu0
  %v383 = vadd.f32 %v299, %v382
  %v384 = vpop.f32.mrf.mxu0
  %385 = vmatprep.mubr.f32.mxu0 0.0
  %v386 = vand.u32 %v34, 4294901760
  %v387 = vsub.f32 %v34, %v386
  %v388 = vand.u32 %v387, 4294901760
  %389 = vmatmul.mubr.f32.gmra.mxu0 %v388
  %v390 = vpop.f32.mrf.mxu0
  %v391 = vadd.f32 %v306, %v390
  %v392 = vpop.f32.mrf.mxu0
  %393 = vdwg.mxu0
  %394 = vmatprep.subr.mxu0 0.0
  %395 = vmatpush1.msra.mxu0 0.0
  %396 = vmatprep.subr.mxu0 0.0
  %397 = vmatpush1.msra.mxu0 0.0
  %398 = vmatprep.subr.mxu0 0.0
  %399 = vmatpush1.msra.mxu0 0.0
  %400 = vmatprep.subr.mxu0 0.0
  %401 = vmatpush1.msra.mxu0 0.0
  %402 = vmatprep.subr.mxu0 0.0
  %403 = vmatpush1.msra.mxu0 0.0
  %404 = vmatprep.subr.mxu0 0.0
  %405 = vmatpush1.msra.mxu0 0.0
  %406 = vmatprep.subr.mxu0 0.0
  %407 = vmatpush1.msra.mxu0 0.0
  %408 = vmatprep.subr.mxu0 0.0
  %409 = vmatpush1.msra.mxu0 0.0
  %410 = vmatprep.subr.mxu0 0.0
  %411 = vmatpush1.msra.mxu0 0.0
  %412 = vmatprep.subr.mxu0 0.0
  %413 = vmatpush1.msra.mxu0 0.0
  %414 = vmatprep.subr.mxu0 0.0
  %415 = vmatpush1.msra.mxu0 0.0
  %416 = vmatprep.subr.mxu0 0.0
  %417 = vmatpush1.msra.mxu0 0.0
  %418 = vmatprep.subr.mxu0 0.0
  %v419 = vand.u32 %v21, 4294901760
  %v420 = vsub.f32 %v21, %v419
  %v421 = vand.u32 %v420, 4294901760
  %422 = vmatpush1.msra.mxu0 %v421
  %423 = vmatprep.subr.mxu0 0.0
  %v424 = vand.u32 %v20, 4294901760
  %v425 = vsub.f32 %v20, %v424
  %v426 = vand.u32 %v425, 4294901760
  %427 = vmatpush1.msra.mxu0 %v426
  %428 = vmatprep.subr.mxu0 0.0
  %v429 = vand.u32 %v19, 4294901760
  %v430 = vsub.f32 %v19, %v429
  %v431 = vand.u32 %v430, 4294901760
  %432 = vmatpush1.msra.mxu0 %v431
  %433 = vmatprep.subr.mxu0 0.0
  %v434 = vand.u32 %v18, 4294901760
  %v435 = vsub.f32 %v18, %v434
  %v436 = vand.u32 %v435, 4294901760
  %437 = vmatpush1.msra.mxu0 %v436
  %438 = vmatprep.subr.mxu0 0.0
  %439 = vmatpush2.msra.mxu0 0.0
  %440 = vmatprep.subr.mxu0 0.0
  %441 = vmatpush2.msra.mxu0 0.0
  %442 = vmatprep.subr.mxu0 0.0
  %443 = vmatpush2.msra.mxu0 0.0
  %444 = vmatprep.subr.mxu0 0.0
  %445 = vmatpush2.msra.mxu0 0.0
  %446 = vmatprep.subr.mxu0 0.0
  %447 = vmatpush2.msra.mxu0 0.0
  %448 = vmatprep.subr.mxu0 0.0
  %449 = vmatpush2.msra.mxu0 0.0
  %450 = vmatprep.subr.mxu0 0.0
  %451 = vmatpush2.msra.mxu0 0.0
  %452 = vmatprep.subr.mxu0 0.0
  %453 = vmatpush2.msra.mxu0 0.0
  %454 = vmatprep.subr.mxu0 0.0
  %455 = vmatpush2.msra.mxu0 0.0
  %456 = vmatprep.subr.mxu0 0.0
  %457 = vmatpush2.msra.mxu0 0.0
  %458 = vmatprep.subr.mxu0 0.0
  %459 = vmatpush2.msra.mxu0 0.0
  %460 = vmatprep.subr.mxu0 0.0
  %461 = vmatpush2.msra.mxu0 0.0
  %462 = vmatprep.subr.mxu0 0.0
  %463 = vmatpush2.msra.mxu0 0.0
  %464 = vmatprep.subr.mxu0 0.0
  %465 = vmatpush2.msra.mxu0 0.0
  %466 = vmatprep.subr.mxu0 0.0
  %467 = vmatpush2.msra.mxu0 0.0
  %468 = vmatprep.subr.mxu0 0.0
  %469 = vmatpush2.msra.mxu0 0.0
  %470 = vmatprep.mubr.f32.mxu0 0.0
  %v471 = vand.u32 %v31, 4294901760
  %472 = vmatmul.mubr.f32.gmra.mxu0 %v471
  %v473 = vpop.f32.mrf.mxu0
  %v474 = vadd.f32 %v383, %v473
  %v475 = vpop.f32.mrf.mxu0
  %476 = vmatprep.mubr.f32.mxu0 0.0
  %v477 = vand.u32 %v34, 4294901760
  %478 = vmatmul.mubr.f32.gmra.mxu0 %v477
  %v479 = vpop.f32.mrf.mxu0
  %v480 = vadd.f32 %v391, %v479
  %v481 = vpop.f32.mrf.mxu0
  %482 = vdwg.mxu0
  %483 = vmatprep.subr.mxu0 0.0
  %484 = vmatpush1.msra.mxu0 0.0
  %485 = vmatprep.subr.mxu0 0.0
  %486 = vmatpush1.msra.mxu0 0.0
  %487 = vmatprep.subr.mxu0 0.0
  %488 = vmatpush1.msra.mxu0 0.0
  %489 = vmatprep.subr.mxu0 0.0
  %490 = vmatpush1.msra.mxu0 0.0
  %491 = vmatprep.subr.mxu0 0.0
  %492 = vmatpush1.msra.mxu0 0.0
  %493 = vmatprep.subr.mxu0 0.0
  %494 = vmatpush1.msra.mxu0 0.0
  %495 = vmatprep.subr.mxu0 0.0
  %496 = vmatpush1.msra.mxu0 0.0
  %497 = vmatprep.subr.mxu0 0.0
  %498 = vmatpush1.msra.mxu0 0.0
  %499 = vmatprep.subr.mxu0 0.0
  %500 = vmatpush1.msra.mxu0 0.0
  %501 = vmatprep.subr.mxu0 0.0
  %502 = vmatpush1.msra.mxu0 0.0
  %503 = vmatprep.subr.mxu0 0.0
  %504 = vmatpush1.msra.mxu0 0.0
  %505 = vmatprep.subr.mxu0 0.0
  %506 = vmatpush1.msra.mxu0 0.0
  %507 = vmatprep.subr.mxu0 0.0
  %v508 = vand.u32 %v21, 4294901760
  %509 = vmatpush1.msra.mxu0 %v508
  %510 = vmatprep.subr.mxu0 0.0
  %v511 = vand.u32 %v20, 4294901760
  %512 = vmatpush1.msra.mxu0 %v511
  %513 = vmatprep.subr.mxu0 0.0
  %v514 = vand.u32 %v19, 4294901760
  %515 = vmatpush1.msra.mxu0 %v514
  %516 = vmatprep.subr.mxu0 0.0
  %v517 = vand.u32 %v18, 4294901760
  %518 = vmatpush1.msra.mxu0 %v517
  %519 = vmatprep.subr.mxu0 0.0
  %520 = vmatpush2.msra.mxu0 0.0
  %521 = vmatprep.subr.mxu0 0.0
  %522 = vmatpush2.msra.mxu0 0.0
  %523 = vmatprep.subr.mxu0 0.0
  %524 = vmatpush2.msra.mxu0 0.0
  %525 = vmatprep.subr.mxu0 0.0
  %526 = vmatpush2.msra.mxu0 0.0
  %527 = vmatprep.subr.mxu0 0.0
  %528 = vmatpush2.msra.mxu0 0.0
  %529 = vmatprep.subr.mxu0 0.0
  %530 = vmatpush2.msra.mxu0 0.0
  %531 = vmatprep.subr.mxu0 0.0
  %532 = vmatpush2.msra.mxu0 0.0
  %533 = vmatprep.subr.mxu0 0.0
  %534 = vmatpush2.msra.mxu0 0.0
  %535 = vmatprep.subr.mxu0 0.0
  %536 = vmatpush2.msra.mxu0 0.0
  %537 = vmatprep.subr.mxu0 0.0
  %538 = vmatpush2.msra.mxu0 0.0
  %539 = vmatprep.subr.mxu0 0.0
  %540 = vmatpush2.msra.mxu0 0.0
  %541 = vmatprep.subr.mxu0 0.0
  %542 = vmatpush2.msra.mxu0 0.0
  %543 = vmatprep.subr.mxu0 0.0
  %544 = vmatpush2.msra.mxu0 0.0
  %545 = vmatprep.subr.mxu0 0.0
  %546 = vmatpush2.msra.mxu0 0.0
  %547 = vmatprep.subr.mxu0 0.0
  %548 = vmatpush2.msra.mxu0 0.0
  %549 = vmatprep.subr.mxu0 0.0
  %550 = vmatpush2.msra.mxu0 0.0
  %551 = vmatprep.mubr.f32.mxu0 0.0
  %v552 = vand.u32 %v31, 4294901760
  %553 = vmatmul.mubr.f32.gmra.mxu0 %v552
  %v554 = vpop.f32.mrf.mxu0
  %v555 = vadd.f32 %v474, %v554
  %v556 = vpop.f32.mrf.mxu0
  %557 = vmatprep.mubr.f32.mxu0 0.0
  %v558 = vand.u32 %v34, 4294901760
  %559 = vmatmul.mubr.f32.gmra.mxu0 %v558
  %v560 = vpop.f32.mrf.mxu0
  %v561 = vadd.f32 %v480, %v560
  %v562 = vpop.f32.mrf.mxu0
  %563 = vdwg.mxu0
  %v564 = vlaneseq
  %v565 = vand.u32 %v564, 127
  %vm566 = vcmask 64512
  %v567 = vsel %vm566, %v555, -inf
  %568 = vmax.xlane.f32.xlu0 %v567
  %v569 = vpop.xlane.xlu0 %568
  %v570 = vsel %vm566, %v561, -inf
  %571 = vmax.xlane.f32.xlu0 %v570
  %v572 = vpop.xlane.xlu0 %571
  %vm573 = vcmp.eq.f32.partialorder %v555, %v569
  %vm574 = vcmp.eq.f32.partialorder %v561, %v572
  %v575 = vsel %vm573, %v565, 8
  %v576 = vsel %vm574, %v565, 8
  %v577 = vsel %vm566, %v575, 2147483647
  %v578 = vand.u32 %v577, 65535
  %v579 = vshra.s32 %v577, 16
  %v580 = vcvt.s32.f32 %v578
  %v581 = vcvt.s32.f32 %v579
  %582 = vmin.xlane.f32.xlu0 %v581
  %v583 = vpop.xlane.xlu0 %582
  %vm584 = vcmp.eq.f32.partialorder %v581, %v583
  %v585 = vsel %vm584, %v580, inf
  %586 = vmin.xlane.f32.xlu0 %v585
  %v587 = vpop.xlane.xlu0 %586
  %v588 = vcvt.f32.s32 %v587
  %v589 = vcvt.f32.s32 %v583
  %v590 = vshll.u32 %v589, 16
  %v591 = vadd.s32 %v590, %v588
  %v592 = vsel %vm566, %v576, 2147483647
  %v593 = vand.u32 %v592, 65535
  %v594 = vshra.s32 %v592, 16
  %v595 = vcvt.s32.f32 %v593
  %v596 = vcvt.s32.f32 %v594
  %597 = vmin.xlane.f32.xlu0 %v596
  %v598 = vpop.xlane.xlu0 %597
  %vm599 = vcmp.eq.f32.partialorder %v596, %v598
  %v600 = vsel %vm599, %v595, inf
  %601 = vmin.xlane.f32.xlu0 %v600
  %v602 = vpop.xlane.xlu0 %601
  %v603 = vcvt.f32.s32 %v602
  %v604 = vcvt.f32.s32 %v598
  %v605 = vshll.u32 %v604, 16
  %v606 = vadd.s32 %v605, %v603
  %vm607 = vcmp.eq.s32.totalorder %v565, %v591
  %vm608 = vcmp.eq.s32.totalorder %v565, %v606
  %v609 = vsel %vm607, -inf, %v555
  %v610 = vsel %vm608, -inf, %v561
  %vm611 = vcmp.eq.s32.totalorder %v565, 0
  %v612 = vsel %vm611, %v591, 0
  %v613 = vsel %vm611, %v606, 0
  %v614 = vsel %vm566, %v609, -inf
  %615 = vmax.xlane.f32.xlu0 %v614
  %v616 = vpop.xlane.xlu0 %615
  %v617 = vsel %vm566, %v610, -inf
  %618 = vmax.xlane.f32.xlu0 %v617
  %v619 = vpop.xlane.xlu0 %618
  %vm620 = vcmp.eq.f32.partialorder %v609, %v616
  %vm621 = vcmp.eq.f32.partialorder %v610, %v619
  %v622 = vsel %vm620, %v565, 8
  %v623 = vsel %vm621, %v565, 8
  %v624 = vsel %vm566, %v622, 2147483647
  %v625 = vand.u32 %v624, 65535
  %v626 = vshra.s32 %v624, 16
  %v627 = vcvt.s32.f32 %v625
  %v628 = vcvt.s32.f32 %v626
  %629 = vmin.xlane.f32.xlu0 %v628
  %v630 = vpop.xlane.xlu0 %629
  %vm631 = vcmp.eq.f32.partialorder %v628, %v630
  %v632 = vsel %vm631, %v627, inf
  %633 = vmin.xlane.f32.xlu0 %v632
  %v634 = vpop.xlane.xlu0 %633
  %v635 = vcvt.f32.s32 %v634
  %v636 = vcvt.f32.s32 %v630
  %v637 = vshll.u32 %v636, 16
  %v638 = vadd.s32 %v637, %v635
  %v639 = vsel %vm566, %v623, 2147483647
  %v640 = vand.u32 %v639, 65535
  %v641 = vshra.s32 %v639, 16
  %v642 = vcvt.s32.f32 %v640
  %v643 = vcvt.s32.f32 %v641
  %644 = vmin.xlane.f32.xlu0 %v643
  %v645 = vpop.xlane.xlu0 %644
  %vm646 = vcmp.eq.f32.partialorder %v643, %v645
  %v647 = vsel %vm646, %v642, inf
  %648 = vmin.xlane.f32.xlu0 %v647
  %v649 = vpop.xlane.xlu0 %648
  %v650 = vcvt.f32.s32 %v649
  %v651 = vcvt.f32.s32 %v645
  %v652 = vshll.u32 %v651, 16
  %v653 = vadd.s32 %v652, %v650
  %vm654 = vcmp.eq.s32.totalorder %v565, %v638
  %vm655 = vcmp.eq.s32.totalorder %v565, %v653
  %vm656 = vmor %vm607, %vm654
  %vm657 = vmor %vm608, %vm655
  %vm658 = vcmp.eq.s32.totalorder %v565, 1
  %v659 = vsel %vm658, %v638, %v612
  %v660 = vsel %vm658, %v653, %v613
  %v661 = vsel %vm656, %v555, -inf
  %v662 = vsel %vm657, %v561, -inf
  %v663 = vsel %vm566, %v661, -inf
  %664 = vmax.xlane.f32.xlu0 %v663
  %v665 = vpop.xlane.xlu0 %664
  %v666 = vsel %vm566, %v662, -inf
  %667 = vmax.xlane.f32.xlu0 %v666
  %v668 = vpop.xlane.xlu0 %667
  %v669 = vsub.f32 %v555, %v665
  %v670 = vsub.f32 %v561, %v668
  %v671 = vmul.f32 %v669, 1.442695
  %v672 = vpow.pop %v671
  %v673 = vmul.f32 %v670, 1.442695
  %v674 = vpow.pop %v673
  %v675 = vsel %vm656, %v672, 0.0
  %v676 = vsel %vm657, %v674, 0.0
  %v677 = vsel %vm566, %v675, 0.0
  %678 = vadd.xlane.f32.xlu0 %v677
  %v679 = vpop.xlane.xlu0 %678
  %v680 = vsel %vm566, %v676, 0.0
  %681 = vadd.xlane.f32.xlu0 %v680
  %v682 = vpop.xlane.xlu0 %681
  %v683 = vrcp.pop %v679
  %v684 = vmul.f32 %v675, %v683
  %v685 = vrcp.pop %v682
  %v686 = vmul.f32 %v676, %v685
  %687 = vst.msk [vmem:[%s3] sm:$0xff] %vm566, %v684
  %688 = vst.msk [vmem:[%s3 + $0x8] sm:$0xff] %vm566, %v686
  %vm689 = vcmask 15360
  %690 = vst.msk [vmem:[%s4] sm:$0xff] %vm689, %v659
  %691 = vst.msk [vmem:[%s4 + $0x8] sm:$0xff] %vm689, %v660
  // Predicated region
  $region14: #{tpu_custom_call.1} parent=0 // pred_check
    _
  $region15: #{tpu_custom_call.1} parent=0 // pred_check_branch
    %693 = sbr.rel (0) target = $region17
  $region16: #{tpu_custom_call.1} parent=0 // pred_region
    _
  $region17: #{tpu_custom_call.1} parent=0 // pred_fallthru
    _
  // Predicated region
  $region18: #{tpu_custom_call.1} parent=0 // pred_check
    _
  $region19: #{tpu_custom_call.1} parent=0 // pred_check_branch
    %695 = sbr.rel (0) target = $region21
  $region20: #{tpu_custom_call.1} parent=0 // pred_region
    _
  $region21: #{tpu_custom_call.1} parent=0 // pred_fallthru
    _
  // Predicated region
  $region22: #{tpu_custom_call.1} parent=0 // pred_check
    _
  $region23: #{tpu_custom_call.1} parent=0 // pred_check_branch
    %697 = sbr.rel (0) target = $region25
  $region24: #{tpu_custom_call.1} parent=0 // pred_region
    _
  $region25: #{tpu_custom_call.1} parent=0 // pred_fallthru
    _
  // Predicated region
  $region26: #{tpu_custom_call.1} parent=0 // pred_check
    _
  $region27: #{tpu_custom_call.1} parent=0 // pred_check_branch
    %699 = sbr.rel (0) target = $region29
  $region28: #{tpu_custom_call.1} parent=0 // pred_region
    _
  $region29: #{tpu_custom_call.1} parent=0 // pred_fallthru
    _

</llo_original>
